<compile_context>
chip_gen: v7x
topology: tpu7x:2x2x1
jax: 0.10.0
libtpu: 0.0.40
codegen_flags: <defaults>
</compile_context>

<pallas_src>
import jax
import jax.numpy as jnp
from jax.experimental import pallas as pl
from jax.experimental.pallas import tpu as pltpu


_LANES = 128
_SUBLANES = 8
_TN_MAX = 4096                      # max rows per tile
_VMEM_PER_BUF = 2 * 1024 * 1024     # per-stream buffer budget (pre double-buffer)


def _cdiv(a, b):
    return -(-a // b)


def _round_down(x, m):
    return (x // m) * m


def _num_tensorcores():
    """Best-effort TensorCore count per chip (2 only on multi-TC chips); default 1."""
    try:
        info = pltpu.get_tpu_info()
    except Exception:
        return 1
    for name in ("num_cores", "core_count", "num_tensorcores", "tensor_core_count"):
        v = getattr(info, name, None)
        if isinstance(v, int) and 1 <= v <= 2:
            return v
    return 1


# ---------------------------------------------------------------------------
# Pallas kernel
# ---------------------------------------------------------------------------
def _make_kernel(tn, steps, n_total, d, with_weight, needs_mask):
    """Per-column |pred - tgt| (* weight) partial-sum kernel.

    grid = (core, step); `step` is the reduction axis.  Each step streams a
    (tn, d) tile of pred/tgt (and weight, in its natural shape) and folds it
    into a vreg-sized (8, d) VMEM accumulator; the last step writes the
    per-core (8, d) partial sums.
    """

    def kernel(*refs):
        if with_weight:
            pred_ref, tgt_ref, w_ref, out_ref, acc_ref = refs
        else:
            pred_ref, tgt_ref, out_ref, acc_ref = refs

        c = pl.program_id(0)
        s = pl.program_id(1)

        @pl.when(s == 0)
        def _():
            acc_ref[...] = jnp.zeros_like(acc_ref)

        # Upcast per-tile (inputs may be bf16).  The "-origin" shift of
        # normalize_line cancels in (pred - tgt); the 1/(roi+eps) scale is
        # applied per-column in the JAX epilogue.
        val = jnp.abs(pred_ref[...].astype(jnp.float32)
                      - tgt_ref[...].astype(jnp.float32))
        if with_weight:
            # w tile is (tn, d) or (tn, 1); broadcasting handles both.
            val = val * w_ref[...].astype(jnp.float32)
        if needs_mask:
            # Ragged tail: rows at/after n_total in a partial block hold
            # unspecified data -> zero them (jnp.where discards NaN/Inf).
            valid = n_total - (c * steps + s) * tn           # traced scalar
            rows = jax.lax.broadcasted_iota(jnp.int32, (tn, d), 0)
            val = jnp.where(rows < valid, val, 0.0)

        # vreg-sized running sum: fold (tn, d) into (8, d) with VALU adds only.
        acc_ref[...] += val.reshape(tn // _SUBLANES, _SUBLANES, d).sum(axis=0)

        @pl.when(s == pl.num_programs(1) - 1)
        def _():
            out_ref[0] = acc_ref[...]

    return kernel


# ---------------------------------------------------------------------------
# Wrapper
# ---------------------------------------------------------------------------
def sparse_line_loss(line, line_target, weight=None, avg_factor=None,
                     num_sample=20, roi_size=(30.0, 60.0), loss_weight=1.0,
                     prefix='', suffix=''):
    """JAX/Pallas equivalent of SparseLineLoss.forward with an L1 loss_line."""
    line = jnp.asarray(line)
    line_target = jnp.asarray(line_target)
    if not jnp.issubdtype(line.dtype, jnp.floating):
        line = line.astype(jnp.float32)
    if not jnp.issubdtype(line_target.dtype, jnp.floating):
        line_target = line_target.astype(jnp.float32)

    d = line.shape[-1]
    assert d == 2 * num_sample and d % 2 == 0, "last dim must be num_sample * 2"

    key = f'{prefix}loss_line{suffix}'

    pred = line.reshape(-1, d)          # contiguous reshape: free, no copy
    tgt = line_target.reshape(-1, d)
    n_total = pred.shape[0]

    if n_total == 0:
        # normalize_line returns the input unchanged; empty L1 mean -> 0.
        return {key: jnp.float32(0.0)}

    # ----- weight: a scalar folds into the final scale; per-row / per-element
    # weights stream in their NATURAL shape (no broadcast materialization).
    w_stream = None
    w_scalar = None
    if weight is not None:
        w = jnp.asarray(weight)
        if not jnp.issubdtype(w.dtype, jnp.floating):
            w = w.astype(jnp.float32)
        if w.size == 1:
            w_scalar = w.reshape(()).astype(jnp.float32)
        elif w.shape == line.shape:
            w_stream = w.reshape(-1, d)                       # elementwise
        elif w.shape == line.shape[:-1] or w.shape == line.shape[:-1] + (1,):
            w_stream = w.reshape(-1, 1)                       # per-row
        else:
            # Rare/odd shape: explicit broadcast fallback (materializes).
            w_stream = jnp.broadcast_to(w, line.shape).reshape(-1, d)
    with_weight = w_stream is not None

    # ----- tiling over the natural (n_total, d) layout ----------------------
    lane_padded = _cdiv(d, _LANES) * _LANES                   # VMEM lane footprint
    tn_cap = max(16, _round_down(_VMEM_PER_BUF // (lane_padded * 4), 16))
    tn_max = min(_TN_MAX, tn_cap)
    tn = min(tn_max, _round_down(n_total, 16)) if n_total >= 16 else 16
    steps_total = _cdiv(n_total, tn)

    ncores = _num_tensorcores()
    if steps_total < ncores:
        ncores = 1
    steps = _cdiv(steps_total, ncores)
    needs_mask = (n_total % tn != 0) or (ncores * steps != steps_total)

    if ncores * steps == steps_total:
        row_map = lambda c, s: (c * steps + s, 0)
    else:
        last_blk = steps_total - 1
        row_map = lambda c, s: (jnp.minimum(c * steps + s, last_blk), 0)

    in_specs = [pl.BlockSpec((tn, d), row_map),
                pl.BlockSpec((tn, d), row_map)]
    operands = [pred, tgt]
    if with_weight:
        in_specs.append(pl.BlockSpec((tn, w_stream.shape[-1]), row_map))
        operands.append(w_stream)
    out_spec = pl.BlockSpec((1, _SUBLANES, d), lambda c, s: (c, 0, 0))

    elems = n_total * d
    bytes_accessed = (pred.size * pred.dtype.itemsize
                      + tgt.size * tgt.dtype.itemsize
                      + (w_stream.size * w_stream.dtype.itemsize if with_weight else 0)
                      + ncores * _SUBLANES * d * 4)
    cost = pl.CostEstimate(flops=(4 if with_weight else 3) * elems,
                           transcendentals=0,
                           bytes_accessed=bytes_accessed)

    partials = pl.pallas_call(
        _make_kernel(tn, steps, n_total, d, with_weight, needs_mask),
        out_shape=jax.ShapeDtypeStruct((ncores, _SUBLANES, d), jnp.float32),
        grid_spec=pltpu.PrefetchScalarGridSpec(
            num_scalar_prefetch=0,
            grid=(ncores, steps),
            in_specs=in_specs,
            out_specs=out_spec,
            scratch_shapes=[pltpu.VMEM((_SUBLANES, d), jnp.float32)],
        ),
        compiler_params=pltpu.CompilerParams(
            # TODO(synk): on v7x, switch the leading axis to pltpu.CORE_PARALLEL
            # if plain "parallel" does not shard across the two TensorCores.
            dimension_semantics=("parallel", "arbitrary"),
            vmem_limit_bytes=32 * 1024 * 1024),
        cost_estimate=cost,
    )(*operands)

    # ----- tiny JAX epilogue: reduce partials + per-column normalization ----
    per_col = jnp.sum(partials, axis=(0, 1))                  # (d,)
    eps = 1e-05
    col = jnp.arange(d)
    roi = jnp.where(col % 2 == 0, jnp.float32(roi_size[0]), jnp.float32(roi_size[1]))
    total = jnp.sum(per_col * (1.0 / (roi + eps)))
    if w_scalar is not None:
        total = total * w_scalar

    # mmdet L1Loss reduction='mean' semantics.
    if avg_factor is None:
        denom = jnp.float32(n_total * d)
    else:
        denom = jnp.asarray(avg_factor, jnp.float32)
    loss = jnp.float32(loss_weight) * total / denom
    return {key: loss}


# ---------------------------------------------------------------------------
# Pure-JAX reference for correctness checking
# ---------------------------------------------------------------------------
def _reference(line, line_target, weight=None, avg_factor=None,
               num_sample=20, roi_size=(30.0, 60.0), loss_weight=1.0):
    def normalize(x):
        x = x.reshape(x.shape[:-1] + (num_sample, 2))
        origin = -jnp.array([roi_size[0] / 2, roi_size[1] / 2], jnp.float32)
        x = x - origin
        norm = jnp.array([roi_size[0], roi_size[1]], jnp.float32) + 1e-05
        x = x / norm
        return x.reshape(x.shape[:-2] + (num_sample * 2,))

    p = normalize(jnp.asarray(line, jnp.float32))
    t = normalize(jnp.asarray(line_target, jnp.float32))
    l = jnp.abs(p - t)
    if weight is not None:
        w = jnp.asarray(weight, jnp.float32)
        if w.ndim == l.ndim - 1:
            w = w[..., None]
        l = l * w
    if avg_factor is None:
        return loss_weight * jnp.mean(l)
    return loss_weight * jnp.sum(l) / jnp.float32(avg_factor)


if __name__ == "__main__":
    key = jax.random.PRNGKey(0)
    k1, k2, k3, k4, k5, k6 = jax.random.split(key, 6)

    num_sample = 20
    roi_size = (30.0, 60.0)
    d = 2 * num_sample                      # 40

    # --- 1. unweighted, 16 rows (aligned: no mask, single step) ------------
    line = jax.random.uniform(k1, (16, d), jnp.float32, minval=-15.0, maxval=15.0)
    tgt = jax.random.uniform(k2, (16, d), jnp.float32, minval=-15.0, maxval=15.0)
    out = sparse_line_loss(line, tgt, num_sample=num_sample, roi_size=roi_size)
    loss = out['loss_line']
    jax.block_until_ready(loss)
    ref = _reference(line, tgt, num_sample=num_sample, roi_size=roi_size)
    assert jnp.allclose(loss, ref, rtol=1e-5, atol=1e-6), (loss, ref)

    # --- 2. elementwise weight + avg_factor + loss_weight -------------------
    w = jax.random.uniform(k3, (16, d), jnp.float32)
    out_w = sparse_line_loss(line, tgt, weight=w, avg_factor=37.0,
                             num_sample=num_sample, roi_size=roi_size,
                             loss_weight=2.0)
    loss_w = out_w['loss_line']
    jax.block_until_ready(loss_w)
    ref_w = _reference(line, tgt, weight=w, avg_factor=37.0,
                       num_sample=num_sample, roi_size=roi_size, loss_weight=2.0)
    assert jnp.allclose(loss_w, ref_w, rtol=1e-5, atol=1e-6), (loss_w, ref_w)

    # --- 3. batched input, ragged row count (mask + multi-step) with a
    #        per-row weight streamed in its natural (.., 1) shape -------------
    line3 = jax.random.uniform(k4, (2, 50, d), jnp.float32, minval=-15.0, maxval=15.0)
    tgt3 = jax.random.uniform(k5, (2, 50, d), jnp.float32, minval=-15.0, maxval=15.0)
    w3 = jax.random.uniform(k6, (2, 50, 1), jnp.float32)
    out3 = sparse_line_loss(line3, tgt3, weight=w3, num_sample=num_sample,
                            roi_size=roi_size, prefix='map_', suffix='_0')
    loss3 = out3['map_loss_line_0']
    jax.block_until_ready(loss3)
    ref3 = _reference(line3, tgt3, weight=w3, num_sample=num_sample,
                      roi_size=roi_size)
    assert jnp.allclose(loss3, ref3, rtol=1e-5, atol=1e-6), (loss3, ref3)

    print("KERNEL_OK")
</pallas_src>

<mosaic_0001>
module attributes {stable_mosaic.version = 11 : i64} {
  func.func @kernel(%arg0: i32, %arg1: i32, %arg2: memref<16x40xf32, #tpu.memory_space<vmem>>, %arg3: memref<16x40xf32, #tpu.memory_space<vmem>>, %arg4: memref<1x8x40xf32, #tpu.memory_space<vmem>>, %arg5: memref<8x40xf32, #tpu.memory_space<vmem>>) attributes {dimension_semantics = [#tpu.dimension_semantics<parallel>, #tpu.dimension_semantics<arbitrary>], iteration_bounds = array<i64: 1, 1>, scalar_prefetch = 0 : i64, scratch_operands = 1 : i64, tpu.core_type = #tpu.core_type<tc>, window_params = [{transform_indices = @transform_0, window_bounds = array<i64: 16, 40>}, {transform_indices = @transform_1, window_bounds = array<i64: 16, 40>}, {transform_indices = @transform_2, window_bounds = array<i64: 1, 8, 40>}]} {
    %c0_i32 = arith.constant 0 : i32
    %0 = arith.cmpi eq, %arg1, %c0_i32 : i32
    %1 = arith.extui %0 : i1 to i32
    %c0_i32_0 = arith.constant 0 : i32
    %2 = arith.cmpi ne, %1, %c0_i32_0 : i32
    scf.if %2 {
      %cst_10 = arith.constant 0.000000e+00 : f32
      %15 = vector.broadcast %cst_10 : f32 to vector<8x40xf32>
      %c0_11 = arith.constant 0 : index
      %c0_12 = arith.constant 0 : index
      %16 = vector.load %arg5[%c0_11, %c0_12] : memref<8x40xf32, #tpu.memory_space<vmem>>, vector<8x40xf32>
      tpu.vector_store %arg5[%c0_11, %c0_12], %15 {strides = array<i32>} : memref<8x40xf32, #tpu.memory_space<vmem>>, vector<8x40xf32>,
    } else {
    }
    %c0 = arith.constant 0 : index
    %c0_1 = arith.constant 0 : index
    %3 = vector.load %arg2[%c0, %c0_1] : memref<16x40xf32, #tpu.memory_space<vmem>>, vector<16x40xf32>
    %c0_2 = arith.constant 0 : index
    %c0_3 = arith.constant 0 : index
    %4 = vector.load %arg3[%c0_2, %c0_3] : memref<16x40xf32, #tpu.memory_space<vmem>>, vector<16x40xf32>
    %5 = arith.subf %3, %4 : vector<16x40xf32>
    %6 = math.absf %5 : vector<16x40xf32>
    %c0_4 = arith.constant 0 : index
    %c0_5 = arith.constant 0 : index
    %7 = vector.load %arg5[%c0_4, %c0_5] : memref<8x40xf32, #tpu.memory_space<vmem>>, vector<8x40xf32>
    %8 = vector.shape_cast %6 : vector<16x40xf32> to vector<2x8x40xf32>
    %cst = arith.constant dense<0.000000e+00> : vector<8x40xf32>
    %9 = vector.multi_reduction <add>, %8, %cst [0] : vector<2x8x40xf32> to vector<8x40xf32>
    %10 = arith.addf %7, %9 : vector<8x40xf32>
    %c0_6 = arith.constant 0 : index
    %c0_7 = arith.constant 0 : index
    %11 = vector.load %arg5[%c0_6, %c0_7] : memref<8x40xf32, #tpu.memory_space<vmem>>, vector<8x40xf32>
    tpu.vector_store %arg5[%c0_6, %c0_7], %10 {strides = array<i32>} : memref<8x40xf32, #tpu.memory_space<vmem>>, vector<8x40xf32>,
    %c0_i32_8 = arith.constant 0 : i32
    %12 = arith.cmpi eq, %arg1, %c0_i32_8 : i32
    %13 = arith.extui %12 : i1 to i32
    %c0_i32_9 = arith.constant 0 : i32
    %14 = arith.cmpi ne, %13, %c0_i32_9 : i32
    scf.if %14 {
      %c0_10 = arith.constant 0 : index
      %c0_11 = arith.constant 0 : index
      %15 = vector.load %arg5[%c0_10, %c0_11] : memref<8x40xf32, #tpu.memory_space<vmem>>, vector<8x40xf32>
      %c0_12 = arith.constant 0 : index
      %c0_13 = arith.constant 0 : index
      %c0_14 = arith.constant 0 : index
      %16 = vector.load %arg4[%c0_12, %c0_13, %c0_14] : memref<1x8x40xf32, #tpu.memory_space<vmem>>, vector<1x8x40xf32>
      %17 = vector.shape_cast %16 : vector<1x8x40xf32> to vector<8x40xf32>
      %18 = vector.shape_cast %15 : vector<8x40xf32> to vector<1x8x40xf32>
      tpu.vector_store %arg4[%c0_12, %c0_13, %c0_14], %18 {strides = array<i32>} : memref<1x8x40xf32, #tpu.memory_space<vmem>>, vector<1x8x40xf32>,
    } else {
    }
    return
  }
  func.func @transform_0(%arg0: i32, %arg1: i32) -> (i32, i32) {
    %c1_i32 = arith.constant 1 : i32
    %0 = arith.muli %arg0, %c1_i32 : i32
    %1 = arith.addi %0, %arg1 : i32
    %c0_i32 = arith.constant 0 : i32
    %c0_i32_0 = arith.constant 0 : i32
    return %1, %c0_i32 : i32, i32
  }
  func.func @transform_1(%arg0: i32, %arg1: i32) -> (i32, i32) {
    %c1_i32 = arith.constant 1 : i32
    %0 = arith.muli %arg0, %c1_i32 : i32
    %1 = arith.addi %0, %arg1 : i32
    %c0_i32 = arith.constant 0 : i32
    %c0_i32_0 = arith.constant 0 : i32
    return %1, %c0_i32 : i32, i32
  }
  func.func @transform_2(%arg0: i32, %arg1: i32) -> (i32, i32, i32) {
    %c0_i32 = arith.constant 0 : i32
    %c0_i32_0 = arith.constant 0 : i32
    %c0_i32_1 = arith.constant 0 : i32
    return %arg0, %c0_i32, %c0_i32_0 : i32, i32, i32
  }
}

</mosaic_0001>

<llo_original>
// kernel: tpu_custom_call.1
$region0: #{tpu_custom_call.1}
  #allocation0 [shape = 'u32[]', space=smem, size = 0x4, offset = 0x4, fixed_abs, tag = 'smem constant byte address 0x4 - core index']
  #allocation1 [shape = 'u32[144,128]{1,0:T(1,128)}', space=vmem, size = 0x12000, scoped, tag = 'internal scratch']
  #allocation2 [shape = 'f32[8,40]{1,0:T(8,128)}', space=vmem, size = 0x1000, scoped, tag = 'scratch operand']
  %s0 = inlined_call_operand.hbm [shape: f32[16,40], index: 0, kind: input, shape index: {}]
  %s1 = inlined_call_operand.hbm [shape: f32[16,40], index: 1, kind: input, shape index: {}]
  %s2 = inlined_call_operand.hbm [shape: f32[1,8,40], index: 2, kind: output, shape index: {}]
  %s3 = sld [smem:[#allocation0]]
  $region34: #{tpu_custom_call.1} parent=0
    _
  %s5 = ssub.s32 1, %s3
  %s6 = scalar_select 0, %s5, %s3
  $region1: #{tpu_custom_call.1} parent=0
    #allocation3 [shape = 'u8[8192]{0}', space=vmem, size = 0x2000, scoped, tag = 'input window, operand 0, single buffered']
    #allocation4 [shape = 's32[1]{0}', space=sflag, size = 0x4, scoped, tag = 'scoped memory for tpu_custom_call.1']
    #allocation5 [shape = 's32[1]{0}', space=sflag, size = 0x4, scoped, tag = 'scoped memory for tpu_custom_call.1']
    #allocation6 [shape = 'u8[8192]{0}', space=vmem, size = 0x2000, scoped, tag = 'input window, operand 1, single buffered']
    #allocation7 [shape = 's32[1]{0}', space=sflag, size = 0x4, scoped, tag = 'scoped memory for tpu_custom_call.1']
    #allocation8 [shape = 'u8[4096]{0}', space=vmem, size = 0x1000, scoped, tag = 'output window, operand 0, single buffered']
    %7 = vsyncpa [#allocation4], 0
    %8 = vsyncpa [#allocation7], 0
    %9 = vsyncpa [#allocation5], 0
    // Predicated region
    $region2: #{tpu_custom_call.1} parent=1 // pred_check
      _
    $region3: #{tpu_custom_call.1} parent=1 // pred_check_branch
      %11 = sbr.rel (0) target = $region5
    $region4: #{tpu_custom_call.1} parent=1 // pred_region
      %s12 = sadd.s32 0, 0
      %s13 = smul.u32 2, %s12
      %s15 = ssub.s32 256, 256
      %16 = vsyncadd [#allocation4], %s15
      %s17 = smul.addr %s13, 128
      %s18 = scalar_lea.hbm %s0, %s17
      %s19 = sshll.u32 [#allocation3], 4
      %s20 = int_to_ptr.vmem [resolvable:$true] %s19
      %25 = dma.hbm_to_vmem [thread:$0]  %s18, 256, %s20, [#allocation4], 128, 128, 8
    $region5: #{tpu_custom_call.1} parent=1 // pred_fallthru
      _
    // Predicated region
    $region6: #{tpu_custom_call.1} parent=1 // pred_check
      _
    $region7: #{tpu_custom_call.1} parent=1 // pred_check_branch
      %27 = sbr.rel (0) target = $region9
    $region8: #{tpu_custom_call.1} parent=1 // pred_region
      %s28 = sadd.s32 0, 0
      %s29 = smul.u32 2, %s28
      %s31 = ssub.s32 256, 256
      %32 = vsyncadd [#allocation7], %s31
      %s33 = smul.addr %s29, 128
      %s34 = scalar_lea.hbm %s1, %s33
      %s35 = sshll.u32 [#allocation6], 4
      %s36 = int_to_ptr.vmem [resolvable:$true] %s35
      %41 = dma.hbm_to_vmem [thread:$0]  %s34, 256, %s36, [#allocation7], 128, 128, 8
    $region9: #{tpu_custom_call.1} parent=1 // pred_fallthru
      _
    // Predicated region
    $region10: #{tpu_custom_call.1} parent=1 // pred_check
      _
    $region11: #{tpu_custom_call.1} parent=1 // pred_check_branch
      %43 = sbr.rel (0) target = $region13
    $region12: #{tpu_custom_call.1} parent=1 // pred_region
      %44 = dma.done [#allocation4], 256
    $region13: #{tpu_custom_call.1} parent=1 // pred_fallthru
      _
    // Predicated region
    $region14: #{tpu_custom_call.1} parent=1 // pred_check
      _
    $region15: #{tpu_custom_call.1} parent=1 // pred_check_branch
      %46 = sbr.rel (0) target = $region17
    $region16: #{tpu_custom_call.1} parent=1 // pred_region
      %47 = dma.done [#allocation7], 256
    $region17: #{tpu_custom_call.1} parent=1 // pred_fallthru
      _
    %s48 = sadd.s32 0, 0
    %s49 = smul.u32 2, %s48
    %s50 = sadd.s32 0, 0
    %s51 = smul.u32 2, %s50
    %p52 = scmp.eq.s32.totalorder 0, 0
    // Predicated region
    $region18: #{tpu_custom_call.1} parent=1 // pred_check
      %p53 = pneg %p52
    $region19: #{tpu_custom_call.1} parent=1 // pred_check_branch
      %55 = sbr.rel (%p53) target = $region21
    $region20: #{tpu_custom_call.1} parent=1 // pred_region
      %vm56 = vcmask 326656
      %57 = vst.msk [vmem:[#allocation2] sm:$0xff] %vm56, 0.0
    $region21: #{tpu_custom_call.1} parent=1 // pred_fallthru
      _
    %v58 = vld [vmem:[#allocation3] sm:$0xff]
    %v59 = vld [vmem:[#allocation3 + $0x8] sm:$0xff]
    %v60 = vld [vmem:[#allocation6] sm:$0xff]
    %v61 = vld [vmem:[#allocation6 + $0x8] sm:$0xff]
    %v62 = vsub.f32 %v58, %v60
    %v63 = vsub.f32 %v59, %v61
    %v64 = vand.u32 2147483647, %v62
    %v65 = vand.u32 2147483647, %v63
    %v66 = vld [vmem:[#allocation2] sm:$0xff]
    %vm67 = vcmask 326656
    %v68 = vsel %vm67, %v64, 0.0
    %v69 = vsel %vm67, %v65, 0.0
    %v70 = vadd.f32 %v68, %v69
    %v71 = vadd.f32 %v66, %v70
    %72 = vst.msk [vmem:[#allocation2] sm:$0xff] %vm67, %v71
    // Predicated region
    $region22: #{tpu_custom_call.1} parent=1 // pred_check
      %p73 = pneg %p52
    $region23: #{tpu_custom_call.1} parent=1 // pred_check_branch
      %75 = sbr.rel (%p73) target = $region25
    $region24: #{tpu_custom_call.1} parent=1 // pred_region
      %v76 = vld [vmem:[#allocation2] sm:$0xff]
      %77 = vst.msk [vmem:[#allocation8] sm:$0xff] %vm67, %v76
    $region25: #{tpu_custom_call.1} parent=1 // pred_fallthru
      _
    // Predicated region
    $region26: #{tpu_custom_call.1} parent=1 // pred_check
      _
    $region27: #{tpu_custom_call.1} parent=1 // pred_check_branch
      %79 = sbr.rel (0) target = $region29
    $region28: #{tpu_custom_call.1} parent=1 // pred_region
      %s81 = ssub.s32 128, 128
      %82 = vsyncadd [#allocation5], %s81
      %s84 = sshll.u32 [#allocation8], 4
      %s85 = int_to_ptr.vmem [resolvable:$true] %s84
      %87 = dma.vmem_to_hbm [thread:$0]  %s85, 128, %s2, [#allocation5]
    $region29: #{tpu_custom_call.1} parent=1 // pred_fallthru
      _
    // Predicated region
    $region30: #{tpu_custom_call.1} parent=1 // pred_check
      _
    $region31: #{tpu_custom_call.1} parent=1 // pred_check_branch
      %89 = sbr.rel (0) target = $region33
    $region32: #{tpu_custom_call.1} parent=1 // pred_region
      %90 = dma.done [#allocation5], 128
    $region33: #{tpu_custom_call.1} parent=1 // pred_fallthru
      _
    %91 = vsyncpa [#allocation4], 1
    %92 = vsyncpa [#allocation7], 1
    %93 = vsyncpa [#allocation5], 1

</llo_original>
